<compile_context>
chip_gen: v7x
topology: tpu7x:2x2x1
jax: 0.10.0
libtpu: 0.0.40
codegen_flags: <defaults>
</compile_context>

<pallas_src>
import functools

import jax
import jax.numpy as jnp
from jax.experimental import pallas as pl
from jax.experimental.pallas import tpu as pltpu


def _round_up(a: int, m: int) -> int:
    return (a + m - 1) // m * m


def _vmem_capacity_bytes() -> int:
    try:
        return int(pltpu.get_tpu_info().vmem_capacity_bytes)
    except Exception:
        return 64 * 1024 * 1024   # conservative fallback (v7x per-TC VMEM)


def _footprint_bytes(t_m: int, t_n: int, n_pad: int, d_pad: int) -> int:
    """Approximate double-buffered VMEM footprint of the tile plan."""
    x_panel = 2 * t_m * n_pad * 2          # bf16 row panel, double-buffered
    w1_tile = 2 * t_n * t_n * 2            # bf16
    w2_tile = 2 * t_n * d_pad * 2          # bf16
    out_tile = 2 * t_m * d_pad * 4         # f32
    h_acc = t_m * t_n * 4                  # f32 scratch
    y_acc = t_m * d_pad * 4                # f32 scratch
    biases = 2 * 8 * (t_n + d_pad) * 4     # f32 (sublane-padded), double-buffered
    return x_panel + w1_tile + w2_tile + out_tile + h_acc + y_acc + biases


def _probe_kernel(x_ref, w1_ref, b1_ref, w2_ref, b2_ref, o_ref, h_acc, y_acc,
                  *, t_n):
    # grid = (batch tiles i, hidden tiles j, input-reduction tiles k)
    j = pl.program_id(1)
    k = pl.program_id(2)
    nj = pl.num_programs(1)
    nk = pl.num_programs(2)

    @pl.when(jnp.logical_and(j == 0, k == 0))
    def _():
        y_acc[...] = jnp.zeros_like(y_acc)

    # Fold b1 straight into the hidden-accumulator init (no separate add later).
    @pl.when(k == 0)
    def _():
        h_acc[...] = jnp.broadcast_to(b1_ref[...], h_acc.shape)

    # x is a resident (t_m, n_pad) row panel; slice this k-chunk (128-aligned).
    x_blk = x_ref[:, pl.ds(pl.multiple_of(k * t_n, 128), t_n)]

    # Layer-1 partial product. W1 is pre-transposed to (in, out), so this is a
    # canonical (t_m, t_n) @ (t_n, t_n) MXU matmul with f32 accumulation.
    h_acc[...] += jnp.dot(x_blk, w1_ref[...], preferred_element_type=jnp.float32)

    # k-reduction for hidden tile j done: ReLU (bias already folded in) and feed
    # the finished hidden slab into layer 2 (also pre-transposed, canonical).
    @pl.when(k == nk - 1)
    def _():
        h = jnp.maximum(h_acc[...], 0.0).astype(w2_ref.dtype)
        y_acc[...] += jnp.dot(h, w2_ref[...], preferred_element_type=jnp.float32)

    # Last (j, k) step for this batch tile: add output bias, store lane-dense.
    @pl.when(jnp.logical_and(j == nj - 1, k == nk - 1))
    def _():
        o_ref[...] = (y_acc[...] + b2_ref[...]).astype(o_ref.dtype)


@functools.partial(jax.jit, static_argnames=("t_m", "t_n", "vmem_limit"))
def _forward_padded(xp, w1t, b1p, w2t, b2p, *, t_m, t_n, vmem_limit):
    b_pad, n_pad = xp.shape
    d_pad = w2t.shape[1]
    grid = (b_pad // t_m, n_pad // t_n, n_pad // t_n)

    return pl.pallas_call(
        functools.partial(_probe_kernel, t_n=t_n),
        out_shape=jax.ShapeDtypeStruct((b_pad, d_pad), jnp.float32),
        grid_spec=pltpu.PrefetchScalarGridSpec(
            num_scalar_prefetch=0,
            grid=grid,
            in_specs=[
                # x row panel: resident across the whole (j, k) inner loops.
                pl.BlockSpec((t_m, n_pad), lambda i, j, k: (i, 0)),
                # W1^T tile: (k-in, j-out), canonical RHS layout.
                pl.BlockSpec((t_n, t_n), lambda i, j, k: (k, j)),
                # b1 tile for hidden tile j.
                pl.BlockSpec((1, t_n), lambda i, j, k: (0, j)),
                # W2^T tile: rows of hidden tile j, all (padded) d outputs.
                pl.BlockSpec((t_n, d_pad), lambda i, j, k: (j, 0)),
                # b2 (full, small).
                pl.BlockSpec((1, d_pad), lambda i, j, k: (0, 0)),
            ],
            out_specs=pl.BlockSpec((t_m, d_pad), lambda i, j, k: (i, 0)),
            scratch_shapes=[
                pltpu.VMEM((t_m, t_n), jnp.float32),     # hidden-tile accumulator
                pltpu.VMEM((t_m, d_pad), jnp.float32),   # output accumulator
            ],
        ),
        compiler_params=pltpu.CompilerParams(
            dimension_semantics=("parallel", "arbitrary", "arbitrary"),
            vmem_limit_bytes=vmem_limit,
        ),
    )(xp, w1t, b1p, w2t, b2p)


def make_nonlinear_probe(w1, b1, w2, b2):
    """Prepares NonLinearProbe parameters once and returns a forward(x) callable.

    w1: (n, n) torch layout (out, in); b1: (n,)
    w2: (d, n) torch layout (out, in); b2: (d,)
    forward(x): x of shape (B, ...) with prod(...)==n -> (B, d) float32.
    """
    n = int(w1.shape[1])
    d = int(w2.shape[0])
    d_pad = _round_up(d, 128)

    vmem_cap = _vmem_capacity_bytes()
    budget = (vmem_cap * 3) // 4          # leave headroom for Mosaic internals

    # --- choose hidden/input tile t_n (independent of batch) -----------------
    t_n_cap = _round_up(n, 128)
    cands = sorted({min(t_n_cap, 1024)}
                   | {c for c in (1024, 512, 256, 128) if c <= t_n_cap},
                   reverse=True)
    t_n = None
    for c in cands:
        if _footprint_bytes(256, c, _round_up(n, c), d_pad) <= budget:
            t_n = c
            break
    if t_n is None:
        t_n = min(t_n_cap, 128)
    n_pad = _round_up(n, t_n)

    if _footprint_bytes(8, t_n, n_pad, d_pad) > budget:
        # TODO(synk): tile the d (output) dimension for very large probes; the
        # current plan keeps the full d_pad slab of W2 / y_acc resident in VMEM.
        raise ValueError(
            f"probe output dim d={d} too large for the untiled-d plan on this chip")

    # --- one-time parameter prep: transpose to (in, out), pad, cast to bf16 --
    w1t = jnp.pad(jnp.asarray(w1, jnp.float32).T,
                  ((0, n_pad - n), (0, n_pad - n))).astype(jnp.bfloat16)
    w2t = jnp.pad(jnp.asarray(w2, jnp.float32).T,
                  ((0, n_pad - n), (0, d_pad - d))).astype(jnp.bfloat16)
    b1p = jnp.pad(jnp.asarray(b1, jnp.float32), (0, n_pad - n)).reshape(1, n_pad)
    b2p = jnp.pad(jnp.asarray(b2, jnp.float32), (0, d_pad - d)).reshape(1, d_pad)
    w1t, w2t, b1p, b2p = jax.block_until_ready((w1t, w2t, b1p, b2p))

    vmem_limit = int(min(max(_footprint_bytes(512, t_n, n_pad, d_pad) * 5 // 4,
                             32 * 1024 * 1024),
                         budget))

    def forward(x):
        B = x.shape[0]
        x2d = x.reshape(B, -1)
        assert x2d.shape[1] == n, (x2d.shape, n)

        # Batch tile: as large as VMEM allows (multiple of 8, <=512 rows) so
        # W1/W2 are streamed from HBM as few times as possible.
        tm_cap = min(512, _round_up(max(B, 1), 8))
        tm_cands = sorted(
            {tm_cap} | {c for c in (512, 256, 128, 64, 32, 16, 8) if c <= tm_cap},
            reverse=True)
        t_m = 8
        for c in tm_cands:
            if _footprint_bytes(c, t_n, n_pad, d_pad) <= budget:
                t_m = c
                break
        b_pad = _round_up(max(B, 1), t_m)

        xp = jnp.pad(x2d.astype(jnp.bfloat16), ((0, b_pad - B), (0, n_pad - n)))
        out = _forward_padded(xp, w1t, b1p, w2t, b2p,
                              t_m=t_m, t_n=t_n, vmem_limit=vmem_limit)
        return out[:B, :d]

    return forward


if __name__ == "__main__":
    key = jax.random.PRNGKey(0)
    k_x, k_w1, k_b1, k_w2, k_b2 = jax.random.split(key, 5)

    # Small shapes implied by forward: x flattened to (B, n); probe maps n -> d.
    B, C, S = 2, 4, 16          # x: (2, 4, 16) -> flattened n = 64
    n = C * S                   # 64
    d = 32

    x = jax.random.normal(k_x, (B, C, S), dtype=jnp.float32)

    # Deterministic parameter init (torch nn.Linear layout: weight (out, in)).
    bound = 1.0 / jnp.sqrt(n)
    w1 = jax.random.uniform(k_w1, (n, n), jnp.float32, -bound, bound)
    b1 = jax.random.uniform(k_b1, (n,), jnp.float32, -bound, bound)
    w2 = jax.random.uniform(k_w2, (d, n), jnp.float32, -bound, bound)
    b2 = jax.random.uniform(k_b2, (d,), jnp.float32, -bound, bound)

    probe_forward = make_nonlinear_probe(w1, b1, w2, b2)   # one-time param prep
    out = probe_forward(x)
    out = jax.block_until_ready(out)

    # Pure-JAX f32 reference of the same semantics (kernel runs bf16 matmuls
    # with f32 accumulation, so allow a bf16-level tolerance).
    x2d = x.reshape(B, -1)
    ref = jnp.maximum(x2d @ w1.T + b1, 0.0) @ w2.T + b2
    assert out.shape == (B, d)
    assert jnp.allclose(out, ref, atol=2e-2, rtol=2e-2), float(
        jnp.max(jnp.abs(out - ref)))

    print("KERNEL_OK")
</pallas_src>

<mosaic_0001>
module attributes {stable_mosaic.version = 11 : i64} {
  func.func @_probe_kernel(%arg0: i32, %arg1: i32, %arg2: i32, %arg3: memref<8x128xbf16, #tpu.memory_space<vmem>>, %arg4: memref<128x128xbf16, #tpu.memory_space<vmem>>, %arg5: memref<1x128xf32, #tpu.memory_space<vmem>>, %arg6: memref<128x128xbf16, #tpu.memory_space<vmem>>, %arg7: memref<1x128xf32, #tpu.memory_space<vmem>>, %arg8: memref<8x128xf32, #tpu.memory_space<vmem>>, %arg9: memref<8x128xf32, #tpu.memory_space<vmem>>, %arg10: memref<8x128xf32, #tpu.memory_space<vmem>>) attributes {dimension_semantics = [#tpu.dimension_semantics<parallel>, #tpu.dimension_semantics<arbitrary>, #tpu.dimension_semantics<arbitrary>], iteration_bounds = array<i64: 1, 1, 1>, scalar_prefetch = 0 : i64, scratch_operands = 2 : i64, tpu.core_type = #tpu.core_type<tc>, window_params = [{transform_indices = @transform_0, window_bounds = array<i64: 8, 128>}, {transform_indices = @transform_1, window_bounds = array<i64: 128, 128>}, {transform_indices = @transform_2, window_bounds = array<i64: 1, 128>}, {transform_indices = @transform_3, window_bounds = array<i64: 128, 128>}, {pipeline_mode = #tpu.pipeline_mode<synchronous>, transform_indices = @transform_4, window_bounds = array<i64: 1, 128>}, {transform_indices = @transform_5, window_bounds = array<i64: 8, 128>}]} {
    %c0_i32 = arith.constant 0 : i32
    %0 = arith.cmpi eq, %arg1, %c0_i32 : i32
    %c0_i32_0 = arith.constant 0 : i32
    %1 = arith.cmpi eq, %arg2, %c0_i32_0 : i32
    %2 = arith.andi %0, %1 : i1
    %3 = arith.extui %2 : i1 to i32
    %c0_i32_1 = arith.constant 0 : i32
    %4 = arith.cmpi ne, %3, %c0_i32_1 : i32
    scf.if %4 {
      %cst_15 = arith.constant 0.000000e+00 : f32
      %25 = vector.broadcast %cst_15 : f32 to vector<8x128xf32>
      %c0_16 = arith.constant 0 : index
      %c0_17 = arith.constant 0 : index
      %26 = vector.load %arg10[%c0_16, %c0_17] : memref<8x128xf32, #tpu.memory_space<vmem>>, vector<8x128xf32>
      tpu.vector_store %arg10[%c0_16, %c0_17], %25 {strides = array<i32>} : memref<8x128xf32, #tpu.memory_space<vmem>>, vector<8x128xf32>,
    } else {
    }
    %c0_i32_2 = arith.constant 0 : i32
    %5 = arith.cmpi eq, %arg2, %c0_i32_2 : i32
    %6 = arith.extui %5 : i1 to i32
    %c0_i32_3 = arith.constant 0 : i32
    %7 = arith.cmpi ne, %6, %c0_i32_3 : i32
    scf.if %7 {
      %c0_15 = arith.constant 0 : index
      %c0_16 = arith.constant 0 : index
      %25 = vector.load %arg5[%c0_15, %c0_16] : memref<1x128xf32, #tpu.memory_space<vmem>>, vector<1x128xf32>
      %26 = vector.shape_cast %25 : vector<1x128xf32> to vector<1x128xf32>
      %27 = vector.broadcast %26 : vector<1x128xf32> to vector<8x128xf32>
      %c0_17 = arith.constant 0 : index
      %c0_18 = arith.constant 0 : index
      %28 = vector.load %arg9[%c0_17, %c0_18] : memref<8x128xf32, #tpu.memory_space<vmem>>, vector<8x128xf32>
      tpu.vector_store %arg9[%c0_17, %c0_18], %27 {strides = array<i32>} : memref<8x128xf32, #tpu.memory_space<vmem>>, vector<8x128xf32>,
    } else {
    }
    %c128_i32 = arith.constant 128 : i32
    %8 = arith.muli %arg2, %c128_i32 : i32
    %9 = tpu.assume_multiple %8, 128 : i32
    %c0 = arith.constant 0 : index
    %10 = arith.index_cast %9 : i32 to index
    %11 = vector.load %arg3[%c0, %10] : memref<8x128xbf16, #tpu.memory_space<vmem>>, vector<8x128xbf16>
    %c0_4 = arith.constant 0 : index
    %c0_5 = arith.constant 0 : index
    %12 = vector.load %arg9[%c0_4, %c0_5] : memref<8x128xf32, #tpu.memory_space<vmem>>, vector<8x128xf32>
    %c0_6 = arith.constant 0 : index
    %c0_7 = arith.constant 0 : index
    %13 = vector.load %arg4[%c0_6, %c0_7] : memref<128x128xbf16, #tpu.memory_space<vmem>>, vector<128x128xbf16>
    %cst = arith.constant dense<0.000000e+00> : vector<8x128xf32>
    %14 = tpu.matmul %11, %13, %cst {dimension_numbers = #tpu.dot_dimension_numbers<[1], [0], [0], [1], [0, 0, 1, 1], [], []>} : vector<8x128xbf16>, vector<128x128xbf16>, vector<8x128xf32> -> vector<8x128xf32>
    %15 = arith.addf %12, %14 : vector<8x128xf32>
    %c0_8 = arith.constant 0 : index
    %c0_9 = arith.constant 0 : index
    %16 = vector.load %arg9[%c0_8, %c0_9] : memref<8x128xf32, #tpu.memory_space<vmem>>, vector<8x128xf32>
    tpu.vector_store %arg9[%c0_8, %c0_9], %15 {strides = array<i32>} : memref<8x128xf32, #tpu.memory_space<vmem>>, vector<8x128xf32>,
    %c0_i32_10 = arith.constant 0 : i32
    %17 = arith.cmpi eq, %arg2, %c0_i32_10 : i32
    %18 = arith.extui %17 : i1 to i32
    %c0_i32_11 = arith.constant 0 : i32
    %19 = arith.cmpi ne, %18, %c0_i32_11 : i32
    scf.if %19 {
      %c0_15 = arith.constant 0 : index
      %c0_16 = arith.constant 0 : index
      %25 = vector.load %arg9[%c0_15, %c0_16] : memref<8x128xf32, #tpu.memory_space<vmem>>, vector<8x128xf32>
      %cst_17 = arith.constant 0.000000e+00 : f32
      %26 = vector.broadcast %cst_17 : f32 to vector<8x128xf32>
      %27 = arith.maximumf %25, %26 : vector<8x128xf32>
      %28 = arith.truncf %27 : vector<8x128xf32> to vector<8x128xbf16>
      %c0_18 = arith.constant 0 : index
      %c0_19 = arith.constant 0 : index
      %29 = vector.load %arg10[%c0_18, %c0_19] : memref<8x128xf32, #tpu.memory_space<vmem>>, vector<8x128xf32>
      %c0_20 = arith.constant 0 : index
      %c0_21 = arith.constant 0 : index
      %30 = vector.load %arg6[%c0_20, %c0_21] : memref<128x128xbf16, #tpu.memory_space<vmem>>, vector<128x128xbf16>
      %cst_22 = arith.constant dense<0.000000e+00> : vector<8x128xf32>
      %31 = tpu.matmul %28, %30, %cst_22 {dimension_numbers = #tpu.dot_dimension_numbers<[1], [0], [0], [1], [0, 0, 1, 1], [], []>} : vector<8x128xbf16>, vector<128x128xbf16>, vector<8x128xf32> -> vector<8x128xf32>
      %32 = arith.addf %29, %31 : vector<8x128xf32>
      %c0_23 = arith.constant 0 : index
      %c0_24 = arith.constant 0 : index
      %33 = vector.load %arg10[%c0_23, %c0_24] : memref<8x128xf32, #tpu.memory_space<vmem>>, vector<8x128xf32>
      tpu.vector_store %arg10[%c0_23, %c0_24], %32 {strides = array<i32>} : memref<8x128xf32, #tpu.memory_space<vmem>>, vector<8x128xf32>,
    } else {
    }
    %c0_i32_12 = arith.constant 0 : i32
    %20 = arith.cmpi eq, %arg1, %c0_i32_12 : i32
    %c0_i32_13 = arith.constant 0 : i32
    %21 = arith.cmpi eq, %arg2, %c0_i32_13 : i32
    %22 = arith.andi %20, %21 : i1
    %23 = arith.extui %22 : i1 to i32
    %c0_i32_14 = arith.constant 0 : i32
    %24 = arith.cmpi ne, %23, %c0_i32_14 : i32
    scf.if %24 {
      %c0_15 = arith.constant 0 : index
      %c0_16 = arith.constant 0 : index
      %25 = vector.load %arg10[%c0_15, %c0_16] : memref<8x128xf32, #tpu.memory_space<vmem>>, vector<8x128xf32>
      %c0_17 = arith.constant 0 : index
      %c0_18 = arith.constant 0 : index
      %26 = vector.load %arg7[%c0_17, %c0_18] : memref<1x128xf32, #tpu.memory_space<vmem>>, vector<1x128xf32>
      %27 = vector.broadcast %26 : vector<1x128xf32> to vector<8x128xf32>
      %28 = arith.addf %25, %27 : vector<8x128xf32>
      %c0_19 = arith.constant 0 : index
      %c0_20 = arith.constant 0 : index
      %29 = vector.load %arg8[%c0_19, %c0_20] : memref<8x128xf32, #tpu.memory_space<vmem>>, vector<8x128xf32>
      tpu.vector_store %arg8[%c0_19, %c0_20], %28 {strides = array<i32>} : memref<8x128xf32, #tpu.memory_space<vmem>>, vector<8x128xf32>,
    } else {
    }
    return
  }
  func.func @transform_0(%arg0: i32, %arg1: i32, %arg2: i32) -> (i32, i32) {
    %c0_i32 = arith.constant 0 : i32
    %c0_i32_0 = arith.constant 0 : i32
    return %arg0, %c0_i32 : i32, i32
  }
  func.func @transform_1(%arg0: i32, %arg1: i32, %arg2: i32) -> (i32, i32) {
    %c0_i32 = arith.constant 0 : i32
    return %arg2, %arg1 : i32, i32
  }
  func.func @transform_2(%arg0: i32, %arg1: i32, %arg2: i32) -> (i32, i32) {
    %c0_i32 = arith.constant 0 : i32
    %c0_i32_0 = arith.constant 0 : i32
    return %c0_i32, %arg1 : i32, i32
  }
  func.func @transform_3(%arg0: i32, %arg1: i32, %arg2: i32) -> (i32, i32) {
    %c0_i32 = arith.constant 0 : i32
    %c0_i32_0 = arith.constant 0 : i32
    return %arg1, %c0_i32 : i32, i32
  }
  func.func @transform_4(%arg0: i32, %arg1: i32, %arg2: i32) -> (i32, i32) {
    %c0_i32 = arith.constant 0 : i32
    %c0_i32_0 = arith.constant 0 : i32
    %c0_i32_1 = arith.constant 0 : i32
    return %c0_i32, %c0_i32_0 : i32, i32
  }
  func.func @transform_5(%arg0: i32, %arg1: i32, %arg2: i32) -> (i32, i32) {
    %c0_i32 = arith.constant 0 : i32
    %c0_i32_0 = arith.constant 0 : i32
    return %arg0, %c0_i32 : i32, i32
  }
}

</mosaic_0001>

<llo_original>
// kernel: _forward_padded.1
$region0: #{_forward_padded.1}
  #allocation0 [shape = 'u32[]', space=smem, size = 0x4, offset = 0x4, fixed_abs, tag = 'smem constant byte address 0x4 - core index']
  #allocation1 [shape = 'u32[144,128]{1,0:T(1,128)}', space=vmem, size = 0x12000, scoped, tag = 'internal scratch']
  #allocation2 [shape = 'f32[8,128]{1,0:T(8,128)}', space=vmem, size = 0x1000, scoped, tag = 'scratch operand']
  #allocation3 [shape = 'f32[8,128]{1,0:T(8,128)}', space=vmem, size = 0x1000, scoped, tag = 'scratch operand']
  %s0 = inlined_call_operand.hbm [shape: bf16[8,128], index: 0, kind: input, shape index: {}]
  %s1 = inlined_call_operand.hbm [shape: bf16[128,128], index: 1, kind: input, shape index: {}]
  %s2 = inlined_call_operand.vmem [shape: f32[1,128], index: 2, kind: input, shape index: {}]
  %s3 = inlined_call_operand.hbm [shape: bf16[128,128], index: 3, kind: input, shape index: {}]
  %s4 = inlined_call_operand.vmem [shape: f32[1,128], index: 4, kind: input, shape index: {}]
  %s5 = inlined_call_operand.hbm [shape: f32[8,128], index: 5, kind: output, shape index: {}]
  %s6 = sld [smem:[#allocation0]]
  $region58: #{_forward_padded.1} parent=0
    _
  %s8 = ssub.s32 1, %s6
  %s9 = scalar_select 0, %s8, %s6
  $region1: #{_forward_padded.1} parent=0
    #allocation4 [shape = 'u8[2048]{0}', space=vmem, size = 0x800, scoped, tag = 'input window, operand 0, single buffered']
    #allocation5 [shape = 's32[1]{0}', space=sflag, size = 0x4, scoped, tag = 'scoped memory for _forward_padded.1']
    #allocation6 [shape = 's32[1]{0}', space=sflag, size = 0x4, scoped, tag = 'scoped memory for _forward_padded.1']
    #allocation7 [shape = 'u8[32768]{0}', space=vmem, size = 0x8000, scoped, tag = 'input window, operand 1, single buffered']
    #allocation8 [shape = 's32[1]{0}', space=sflag, size = 0x4, scoped, tag = 'scoped memory for _forward_padded.1']
    #allocation9 [shape = 'u8[32768]{0}', space=vmem, size = 0x8000, scoped, tag = 'input window, operand 3, single buffered']
    #allocation10 [shape = 'u8[4096]{0}', space=vmem, size = 0x1000, scoped, tag = 'output window, operand 0, single buffered']
    %10 = vsyncpa [#allocation5], 0
    %11 = vsyncpa [#allocation8], 0
    %12 = vsyncpa [#allocation6], 0
    // Predicated region
    $region2: #{_forward_padded.1} parent=1 // pred_check
      _
    $region3: #{_forward_padded.1} parent=1 // pred_check_branch
      %14 = sbr.rel (0) target = $region5
    $region4: #{_forward_padded.1} parent=1 // pred_region
      %s16 = ssub.s32 64, 64
      %17 = vsyncadd [#allocation5], %s16
      %s19 = sshll.u32 [#allocation4], 4
      %s20 = int_to_ptr.vmem [resolvable:$true] %s19
      %22 = dma.hbm_to_vmem [thread:$0]  %s0, 64, %s20, [#allocation5]
    $region5: #{_forward_padded.1} parent=1 // pred_fallthru
      _
    // Predicated region
    $region6: #{_forward_padded.1} parent=1 // pred_check
      _
    $region7: #{_forward_padded.1} parent=1 // pred_check_branch
      %24 = sbr.rel (0) target = $region9
    $region8: #{_forward_padded.1} parent=1 // pred_region
      %s26 = ssub.s32 1024, 1024
      %27 = vsyncadd [#allocation8], %s26
      %s28 = sshll.u32 [#allocation7], 4
      %s29 = int_to_ptr.vmem [resolvable:$true] %s28
      %34 = dma.hbm_to_vmem [thread:$0]  %s1, 1024, %s29, [#allocation8], 64, 64, 4
    $region9: #{_forward_padded.1} parent=1 // pred_fallthru
      _
    // Predicated region
    $region10: #{_forward_padded.1} parent=1 // pred_check
      _
    $region11: #{_forward_padded.1} parent=1 // pred_check_branch
      %36 = sbr.rel (0) target = $region13
    $region12: #{_forward_padded.1} parent=1 // pred_region
      _
    $region13: #{_forward_padded.1} parent=1 // pred_fallthru
      _
    // Predicated region
    $region14: #{_forward_padded.1} parent=1 // pred_check
      _
    $region15: #{_forward_padded.1} parent=1 // pred_check_branch
      %38 = sbr.rel (0) target = $region17
    $region16: #{_forward_padded.1} parent=1 // pred_region
      %s40 = ssub.s32 1024, 1024
      %41 = vsyncadd [#allocation8], %s40
      %s42 = sshll.u32 [#allocation9], 4
      %s43 = int_to_ptr.vmem [resolvable:$true] %s42
      %48 = dma.hbm_to_vmem [thread:$0]  %s3, 1024, %s43, [#allocation8], 64, 64, 4
    $region17: #{_forward_padded.1} parent=1 // pred_fallthru
      _
    // Predicated region
    $region18: #{_forward_padded.1} parent=1 // pred_check
      _
    $region19: #{_forward_padded.1} parent=1 // pred_check_branch
      %50 = sbr.rel (0) target = $region21
    $region20: #{_forward_padded.1} parent=1 // pred_region
      _
    $region21: #{_forward_padded.1} parent=1 // pred_fallthru
      _
    // Predicated region
    $region22: #{_forward_padded.1} parent=1 // pred_check
      _
    $region23: #{_forward_padded.1} parent=1 // pred_check_branch
      %52 = sbr.rel (0) target = $region25
    $region24: #{_forward_padded.1} parent=1 // pred_region
      %53 = dma.done [#allocation5], 64
    $region25: #{_forward_padded.1} parent=1 // pred_fallthru
      _
    // Predicated region
    $region26: #{_forward_padded.1} parent=1 // pred_check
      _
    $region27: #{_forward_padded.1} parent=1 // pred_check_branch
      %55 = sbr.rel (0) target = $region29
    $region28: #{_forward_padded.1} parent=1 // pred_region
      %56 = dma.done [#allocation8], 1024
    $region29: #{_forward_padded.1} parent=1 // pred_fallthru
      _
    // Predicated region
    $region30: #{_forward_padded.1} parent=1 // pred_check
      _
    $region31: #{_forward_padded.1} parent=1 // pred_check_branch
      %58 = sbr.rel (0) target = $region33
    $region32: #{_forward_padded.1} parent=1 // pred_region
      %59 = dma.done [#allocation8], 1024
    $region33: #{_forward_padded.1} parent=1 // pred_fallthru
      _
    %p61 = scmp.eq.s32.totalorder 0, 0
    %p62 = scmp.eq.s32.totalorder 0, 0
    %p63 = pnand %p61, %p62
    %p64 = pneg %p63
    // Predicated region
    $region34: #{_forward_padded.1} parent=1 // pred_check
      _
    $region35: #{_forward_padded.1} parent=1 // pred_check_branch
      %66 = sbr.rel (%p63) target = $region37
    $region36: #{_forward_padded.1} parent=1 // pred_region
      %67 = vst [vmem:[#allocation3] sm:$0xff] 0.0
    $region37: #{_forward_padded.1} parent=1 // pred_fallthru
      _
    // Predicated region
    $region38: #{_forward_padded.1} parent=1 // pred_check
      %p68 = pneg %p62
    $region39: #{_forward_padded.1} parent=1 // pred_check_branch
      %70 = sbr.rel (%p68) target = $region41
    $region40: #{_forward_padded.1} parent=1 // pred_region
      %v71 = vld [vmem:[%s2] sm:$0x1]
      %v73 = vlaneseq
      %v74 = vshrl.u32 %v73, 7
      %v75 = vsub.s32 0, %v74
      %v76 = vrot.slane %v71, %v75
      %78 = vst [vmem:[#allocation2] sm:$0xff] %v76
    $region41: #{_forward_padded.1} parent=1 // pred_fallthru
      _
    %s79 = smul.u32 0, 128
    %s80 = sshra.s32 %s79, 7
    %s81 = sand.u32 %s79, 127
    %s82 = smul.addr %s80, 4
    %s83 = scalar_lea.vmem [#allocation4], %s82
    %v84 = vld [vmem:[%s83] sm:$0xf]
    %v85 = vld [vmem:[#allocation2] sm:$0xff]
    %v86 = vld [vmem:[#allocation7] sm:$0xf]
    %v87 = vld [vmem:[#allocation7 + $0x4] sm:$0xf]
    %v88 = vld [vmem:[#allocation7 + $0x8] sm:$0xf]
    %v89 = vld [vmem:[#allocation7 + $0xc] sm:$0xf]
    %v90 = vld [vmem:[#allocation7 + $0x10] sm:$0xf]
    %v91 = vld [vmem:[#allocation7 + $0x14] sm:$0xf]
    %v92 = vld [vmem:[#allocation7 + $0x18] sm:$0xf]
    %v93 = vld [vmem:[#allocation7 + $0x1c] sm:$0xf]
    %v94 = vld [vmem:[#allocation7 + $0x20] sm:$0xf]
    %v95 = vld [vmem:[#allocation7 + $0x24] sm:$0xf]
    %v96 = vld [vmem:[#allocation7 + $0x28] sm:$0xf]
    %v97 = vld [vmem:[#allocation7 + $0x2c] sm:$0xf]
    %v98 = vld [vmem:[#allocation7 + $0x30] sm:$0xf]
    %v99 = vld [vmem:[#allocation7 + $0x34] sm:$0xf]
    %v100 = vld [vmem:[#allocation7 + $0x38] sm:$0xf]
    %v101 = vld [vmem:[#allocation7 + $0x3c] sm:$0xf]
    %v118 = vunpack.c.l.b16 %v86
    %v119 = vunpack.c.l.b16 %v87
    %v120 = vunpack.c.l.b16 %v88
    %v121 = vunpack.c.l.b16 %v89
    %v122 = vunpack.c.l.b16 %v90
    %v123 = vunpack.c.l.b16 %v91
    %v124 = vunpack.c.l.b16 %v92
    %v125 = vunpack.c.l.b16 %v93
    %v126 = vunpack.c.l.b16 %v94
    %v127 = vunpack.c.l.b16 %v95
    %v128 = vunpack.c.l.b16 %v96
    %v129 = vunpack.c.l.b16 %v97
    %v130 = vunpack.c.l.b16 %v98
    %v131 = vunpack.c.l.b16 %v99
    %v132 = vunpack.c.l.b16 %v100
    %v133 = vunpack.c.l.b16 %v101
    %v134 = vpack.c.b16 %v119, %v118
    %v135 = vpack.c.b16 %v121, %v120
    %v136 = vpack.c.b16 %v123, %v122
    %v137 = vpack.c.b16 %v125, %v124
    %v138 = vpack.c.b16 %v127, %v126
    %v139 = vpack.c.b16 %v129, %v128
    %v140 = vpack.c.b16 %v131, %v130
    %v141 = vpack.c.b16 %v133, %v132
    %150 = vmatprep.subr.bf16.mxu0 0
    %151 = vmatpush1.bf16.msra.mxu0 %v134
    %152 = vmatprep.subr.bf16.mxu0 0
    %153 = vmatpush1.bf16.msra.mxu0 %v135
    %154 = vmatprep.subr.bf16.mxu0 0
    %155 = vmatpush1.bf16.msra.mxu0 %v136
    %156 = vmatprep.subr.bf16.mxu0 0
    %157 = vmatpush1.bf16.msra.mxu0 %v137
    %158 = vmatprep.subr.bf16.mxu0 0
    %159 = vmatpush1.bf16.msra.mxu0 %v138
    %160 = vmatprep.subr.bf16.mxu0 0
    %161 = vmatpush1.bf16.msra.mxu0 %v139
    %162 = vmatprep.subr.bf16.mxu0 0
    %163 = vmatpush1.bf16.msra.mxu0 %v140
    %164 = vmatprep.subr.bf16.mxu0 0
    %165 = vmatpush1.bf16.msra.mxu0 %v141
    %166 = vmatprep.subr.bf16.mxu0 0
    %167 = vmatpush1.bf16.msra.mxu0 0
    %168 = vmatprep.subr.bf16.mxu0 0
    %169 = vmatpush1.bf16.msra.mxu0 0
    %170 = vmatprep.subr.bf16.mxu0 0
    %171 = vmatpush1.bf16.msra.mxu0 0
    %172 = vmatprep.subr.bf16.mxu0 0
    %173 = vmatpush1.bf16.msra.mxu0 0
    %174 = vmatprep.subr.bf16.mxu0 0
    %175 = vmatpush1.bf16.msra.mxu0 0
    %176 = vmatprep.subr.bf16.mxu0 0
    %177 = vmatpush1.bf16.msra.mxu0 0
    %178 = vmatprep.subr.bf16.mxu0 0
    %179 = vmatpush1.bf16.msra.mxu0 0
    %180 = vmatprep.subr.bf16.mxu0 0
    %181 = vmatpush1.bf16.msra.mxu0 0
    %182 = vmatprep.mubr.bf16.mxu0 0
    %183 = vmatmul.mubr.bf16.gmra.mrb[0].mxu0 %v84
    %v184 = vpop.f32.mrb[0].mxu0
    %v185 = vadd.f32 0.0, %v184
    %v186 = vpop.f32.mrb[0].mxu0
    %v187 = vpop.f32.mrb[0].mxu0
    %v188 = vpop.f32.mrb[0].mxu0
    %189 = vdwg.mxu0
    %v190 = vadd.f32 %v85, %v185
    %191 = vst [vmem:[#allocation2] sm:$0xff] %v190
    // Predicated region
    $region42: #{_forward_padded.1} parent=1 // pred_check
      %p192 = pneg %p62
    $region43: #{_forward_padded.1} parent=1 // pred_check_branch
      %194 = sbr.rel (%p192) target = $region45
    $region44: #{_forward_padded.1} parent=1 // pred_region
      %v195 = vld [vmem:[#allocation2] sm:$0xff]
      %v196 = vmax.f32 %v195, 0.0
      %v197 = vpack.c.bf16 %v196, %v196
      %v198 = vld [vmem:[#allocation3] sm:$0xff]
      %v199 = vld [vmem:[#allocation9] sm:$0xf]
      %v200 = vld [vmem:[#allocation9 + $0x4] sm:$0xf]
      %v201 = vld [vmem:[#allocation9 + $0x8] sm:$0xf]
      %v202 = vld [vmem:[#allocation9 + $0xc] sm:$0xf]
      %v203 = vld [vmem:[#allocation9 + $0x10] sm:$0xf]
      %v204 = vld [vmem:[#allocation9 + $0x14] sm:$0xf]
      %v205 = vld [vmem:[#allocation9 + $0x18] sm:$0xf]
      %v206 = vld [vmem:[#allocation9 + $0x1c] sm:$0xf]
      %v207 = vld [vmem:[#allocation9 + $0x20] sm:$0xf]
      %v208 = vld [vmem:[#allocation9 + $0x24] sm:$0xf]
      %v209 = vld [vmem:[#allocation9 + $0x28] sm:$0xf]
      %v210 = vld [vmem:[#allocation9 + $0x2c] sm:$0xf]
      %v211 = vld [vmem:[#allocation9 + $0x30] sm:$0xf]
      %v212 = vld [vmem:[#allocation9 + $0x34] sm:$0xf]
      %v213 = vld [vmem:[#allocation9 + $0x38] sm:$0xf]
      %v214 = vld [vmem:[#allocation9 + $0x3c] sm:$0xf]
      %v231 = vunpack.c.l.b16 %v199
      %v232 = vunpack.c.l.b16 %v200
      %v233 = vunpack.c.l.b16 %v201
      %v234 = vunpack.c.l.b16 %v202
      %v235 = vunpack.c.l.b16 %v203
      %v236 = vunpack.c.l.b16 %v204
      %v237 = vunpack.c.l.b16 %v205
      %v238 = vunpack.c.l.b16 %v206
      %v239 = vunpack.c.l.b16 %v207
      %v240 = vunpack.c.l.b16 %v208
      %v241 = vunpack.c.l.b16 %v209
      %v242 = vunpack.c.l.b16 %v210
      %v243 = vunpack.c.l.b16 %v211
      %v244 = vunpack.c.l.b16 %v212
      %v245 = vunpack.c.l.b16 %v213
      %v246 = vunpack.c.l.b16 %v214
      %v247 = vpack.c.b16 %v232, %v231
      %v248 = vpack.c.b16 %v234, %v233
      %v249 = vpack.c.b16 %v236, %v235
      %v250 = vpack.c.b16 %v238, %v237
      %v251 = vpack.c.b16 %v240, %v239
      %v252 = vpack.c.b16 %v242, %v241
      %v253 = vpack.c.b16 %v244, %v243
      %v254 = vpack.c.b16 %v246, %v245
      %263 = vmatprep.subr.bf16.mxu0 0
      %264 = vmatpush1.bf16.msra.mxu0 %v247
      %265 = vmatprep.subr.bf16.mxu0 0
      %266 = vmatpush1.bf16.msra.mxu0 %v248
      %267 = vmatprep.subr.bf16.mxu0 0
      %268 = vmatpush1.bf16.msra.mxu0 %v249
      %269 = vmatprep.subr.bf16.mxu0 0
      %270 = vmatpush1.bf16.msra.mxu0 %v250
      %271 = vmatprep.subr.bf16.mxu0 0
      %272 = vmatpush1.bf16.msra.mxu0 %v251
      %273 = vmatprep.subr.bf16.mxu0 0
      %274 = vmatpush1.bf16.msra.mxu0 %v252
      %275 = vmatprep.subr.bf16.mxu0 0
      %276 = vmatpush1.bf16.msra.mxu0 %v253
      %277 = vmatprep.subr.bf16.mxu0 0
      %278 = vmatpush1.bf16.msra.mxu0 %v254
      %279 = vmatprep.subr.bf16.mxu0 0
      %280 = vmatpush1.bf16.msra.mxu0 0
      %281 = vmatprep.subr.bf16.mxu0 0
      %282 = vmatpush1.bf16.msra.mxu0 0
      %283 = vmatprep.subr.bf16.mxu0 0
      %284 = vmatpush1.bf16.msra.mxu0 0
      %285 = vmatprep.subr.bf16.mxu0 0
      %286 = vmatpush1.bf16.msra.mxu0 0
      %287 = vmatprep.subr.bf16.mxu0 0
      %288 = vmatpush1.bf16.msra.mxu0 0
      %289 = vmatprep.subr.bf16.mxu0 0
      %290 = vmatpush1.bf16.msra.mxu0 0
      %291 = vmatprep.subr.bf16.mxu0 0
      %292 = vmatpush1.bf16.msra.mxu0 0
      %293 = vmatprep.subr.bf16.mxu0 0
      %294 = vmatpush1.bf16.msra.mxu0 0
      %295 = vmatprep.mubr.bf16.mxu0 0
      %296 = vmatmul.mubr.bf16.gmra.mrb[0].mxu0 %v197
      %v297 = vpop.f32.mrb[0].mxu0
      %v298 = vadd.f32 0.0, %v297
      %v299 = vpop.f32.mrb[0].mxu0
      %v300 = vpop.f32.mrb[0].mxu0
      %v301 = vpop.f32.mrb[0].mxu0
      %302 = vdwg.mxu0
      %v303 = vadd.f32 %v198, %v298
      %304 = vst [vmem:[#allocation3] sm:$0xff] %v303
    $region45: #{_forward_padded.1} parent=1 // pred_fallthru
      _
    // Predicated region
    $region46: #{_forward_padded.1} parent=1 // pred_check
      _
    $region47: #{_forward_padded.1} parent=1 // pred_check_branch
      %306 = sbr.rel (%p63) target = $region49
    $region48: #{_forward_padded.1} parent=1 // pred_region
      %v307 = vld [vmem:[#allocation3] sm:$0xff]
      %v308 = vld [vmem:[%s4] sm:$0x1]
      %v310 = vlaneseq
      %v311 = vshrl.u32 %v310, 7
      %v312 = vsub.s32 0, %v311
      %v313 = vrot.slane %v308, %v312
      %v315 = vadd.f32 %v307, %v313
      %316 = vst [vmem:[#allocation10] sm:$0xff] %v315
    $region49: #{_forward_padded.1} parent=1 // pred_fallthru
      _
    // Predicated region
    $region50: #{_forward_padded.1} parent=1 // pred_check
      _
    $region51: #{_forward_padded.1} parent=1 // pred_check_branch
      %318 = sbr.rel (0) target = $region53
    $region52: #{_forward_padded.1} parent=1 // pred_region
      %s320 = ssub.s32 128, 128
      %321 = vsyncadd [#allocation6], %s320
      %s323 = sshll.u32 [#allocation10], 4
      %s324 = int_to_ptr.vmem [resolvable:$true] %s323
      %326 = dma.vmem_to_hbm [thread:$0]  %s324, 128, %s5, [#allocation6]
    $region53: #{_forward_padded.1} parent=1 // pred_fallthru
      _
    // Predicated region
    $region54: #{_forward_padded.1} parent=1 // pred_check
      _
    $region55: #{_forward_padded.1} parent=1 // pred_check_branch
      %328 = sbr.rel (0) target = $region57
    $region56: #{_forward_padded.1} parent=1 // pred_region
      %329 = dma.done [#allocation6], 128
    $region57: #{_forward_padded.1} parent=1 // pred_fallthru
      _
    %330 = vsyncpa [#allocation5], 1
    %331 = vsyncpa [#allocation8], 1
    %332 = vsyncpa [#allocation6], 1

</llo_original>
